<compile_context>
chip_gen: v5e
topology: v5e:2x2
jax: 0.10.0
libtpu: 0.0.40
codegen_flags: <defaults>
</compile_context>

<pallas_src>
import functools

import jax
import jax.numpy as jnp
from jax.experimental import pallas as pl
from jax.experimental.pallas import tpu as pltpu

_LANE = 128
_SUBLANE = 8
_MIN_TILE_ELEMS = _LANE * _SUBLANE       # 1024: one full (8,128) f32 vreg
_MAX_TILE_ELEMS = 32 * 1024              # 256 rows x 128 lanes = 128 KiB/block


def _siso_mlp_kernel(x_ref, w1_ref, b1_ref, w2_ref, b2_ref, o_ref, *, hidden):
    # x_ref : (TILE_ROWS, 128) VMEM  -- batch packed onto dense (8,128) tiles
    # w1_ref: (hidden,) SMEM         -- fc1 weight (input_size == 1)
    # b1_ref: (hidden,) SMEM         -- fc1 bias
    # w2_ref: (hidden,) SMEM         -- fc2 weight (output_size == 1)
    # b2_ref: (1,)      SMEM         -- fc2 bias
    # o_ref : (TILE_ROWS, 128) VMEM  -- lane/sublane-dense output
    x = x_ref[...]
    acc = jnp.zeros_like(x)
    # Static unroll over the small, fixed hidden dim: each step is two
    # scalar-splat mul/adds plus a max — pure VPU work, no XLU reduce, no
    # broadcast materialization, no per-step weight DMAs.
    for j in range(hidden):
        h = jnp.maximum(w1_ref[j] * x + b1_ref[j], 0.0)
        acc = acc + w2_ref[j] * h
    o_ref[...] = jnp.maximum(acc + b2_ref[0], 0.0)


def siso_mlp(x, w1, b1, w2, b2, *, min_pallas_batch=0):
    """Forward pass of SISOMLP.

    x : (N, 1) float32                      (input_size == 1)
    w1: (hidden, 1), b1: (hidden,)          fc1, PyTorch nn.Linear layout
    w2: (1, hidden), b2: (1,)               fc2, PyTorch nn.Linear layout
    returns (N, 1) float32

    min_pallas_batch: if N < this, use a trivially-fused XLA expression
    (recommended ~8192 in production; 0 here so the kernel path always runs).
    """
    n, in_size = x.shape
    hidden = w1.shape[0]
    out_size = w2.shape[0]
    assert in_size == 1 and out_size == 1, "SISO: single input, single output"

    if n < min_pallas_batch:
        h = jnp.maximum(x @ w1.T + b1, 0.0)
        return jnp.maximum(h @ w2.T + b2, 0.0)

    # --- host-side layout prep (weights/biases as flat SMEM scalars) ---
    w1f = w1.reshape(hidden).astype(jnp.float32)
    b1f = b1.reshape(hidden).astype(jnp.float32)
    w2f = w2.reshape(hidden).astype(jnp.float32)     # == w2.T flattened
    b2f = b2.reshape(1).astype(jnp.float32)

    # --- batch packing onto full (8,128) tiles + tile-size selection ---
    padded_n = pl.cdiv(n, _MIN_TILE_ELEMS) * _MIN_TILE_ELEMS
    if padded_n <= _MAX_TILE_ELEMS:
        tile_elems = padded_n                          # single grid step
    elif padded_n <= 2 * _MAX_TILE_ELEMS:
        # exactly 2 grid steps so both v7x TensorCores get work
        tile_elems = pl.cdiv(padded_n // 2, _MIN_TILE_ELEMS) * _MIN_TILE_ELEMS
    else:
        tile_elems = _MAX_TILE_ELEMS                   # >= 3 grid steps
    padded_n = pl.cdiv(padded_n, tile_elems) * tile_elems

    x_flat = x.reshape(n).astype(jnp.float32)
    if padded_n != n:
        x_flat = jnp.pad(x_flat, (0, padded_n - n))
    rows = padded_n // _LANE
    tile_rows = tile_elems // _LANE                    # multiple of 8
    x_2d = x_flat.reshape(rows, _LANE)

    grid = (rows // tile_rows,)

    out = pl.pallas_call(
        functools.partial(_siso_mlp_kernel, hidden=hidden),
        out_shape=jax.ShapeDtypeStruct((rows, _LANE), jnp.float32),
        grid=grid,
        in_specs=[
            pl.BlockSpec((tile_rows, _LANE), lambda i: (i, 0)),       # x tile
            pl.BlockSpec(memory_space=pltpu.MemorySpace.SMEM),        # w1
            pl.BlockSpec(memory_space=pltpu.MemorySpace.SMEM),        # b1
            pl.BlockSpec(memory_space=pltpu.MemorySpace.SMEM),        # w2
            pl.BlockSpec(memory_space=pltpu.MemorySpace.SMEM),        # b2
        ],
        out_specs=pl.BlockSpec((tile_rows, _LANE), lambda i: (i, 0)),
        compiler_params=pltpu.CompilerParams(
            dimension_semantics=("parallel",),         # 2 TCs on v7x
            vmem_limit_bytes=32 * 1024 * 1024,
        ),
    )(x_2d, w1f, b1f, w2f, b2f)

    # padded lanes hold garbage derived from relu(b1); slice them off
    return out.reshape(padded_n)[:n].reshape(n, 1)


def siso_mlp_reference(x, w1, b1, w2, b2):
    h = jnp.maximum(x @ w1.T + b1, 0.0)
    return jnp.maximum(h @ w2.T + b2, 0.0)


if __name__ == "__main__":
    # SISO: single-input single-output MLP. The surrounding PyTorch script
    # reshapes the 1-D series to (N, 1), so input_size = output_size = 1.
    input_size, hidden_size, output_size = 1, 32, 1

    key = jax.random.PRNGKey(0)
    kx, k1, k2, k3, k4, kx2 = jax.random.split(key, 6)

    # nn.Linear shapes: weight (out, in), bias (out,)
    w1 = jax.random.normal(k1, (hidden_size, input_size), jnp.float32) * 0.1
    b1 = jax.random.normal(k2, (hidden_size,), jnp.float32) * 0.1
    w2 = jax.random.normal(k3, (output_size, hidden_size), jnp.float32) * 0.1
    b2 = jax.random.normal(k4, (output_size,), jnp.float32) * 0.1

    # Small demo batch (single-tile, padded path).
    batch = 8
    x = jax.random.normal(kx, (batch,), dtype=jnp.float32).reshape(batch, 1)
    out = jax.block_until_ready(siso_mlp(x, w1, b1, w2, b2))
    ref = siso_mlp_reference(x, w1, b1, w2, b2)
    assert out.shape == (batch, output_size)
    assert jnp.allclose(out, ref, atol=1e-5, rtol=1e-5)

    # Larger batch to exercise the multi-step (>=3 tiles) grid path.
    big = 70_000
    x_big = jax.random.normal(kx2, (big,), dtype=jnp.float32).reshape(big, 1)
    out_big = jax.block_until_ready(siso_mlp(x_big, w1, b1, w2, b2))
    ref_big = siso_mlp_reference(x_big, w1, b1, w2, b2)
    assert out_big.shape == (big, output_size)
    assert jnp.allclose(out_big, ref_big, atol=1e-5, rtol=1e-5)

    print("KERNEL_OK")
</pallas_src>

<mosaic_0001>
module attributes {stable_mosaic.version = 11 : i64} {
  func.func @_siso_mlp_kernel(%arg0: i32, %arg1: memref<8x128xf32, #tpu.memory_space<vmem>>, %arg2: memref<32xf32, #tpu.memory_space<smem>>, %arg3: memref<32xf32, #tpu.memory_space<smem>>, %arg4: memref<32xf32, #tpu.memory_space<smem>>, %arg5: memref<1xf32, #tpu.memory_space<smem>>, %arg6: memref<8x128xf32, #tpu.memory_space<vmem>>) attributes {dimension_semantics = [#tpu.dimension_semantics<parallel>], iteration_bounds = array<i64: 1>, scalar_prefetch = 0 : i64, scratch_operands = 0 : i64, tpu.core_type = #tpu.core_type<tc>, window_params = [{transform_indices = @transform_0, window_bounds = array<i64: 8, 128>}, {transform_indices = @transform_1, window_bounds = array<i64: 32>}, {transform_indices = @transform_2, window_bounds = array<i64: 32>}, {transform_indices = @transform_3, window_bounds = array<i64: 32>}, {transform_indices = @transform_4, window_bounds = array<i64: 1>}, {transform_indices = @transform_5, window_bounds = array<i64: 8, 128>}]} {
    %c0 = arith.constant 0 : index
    %c0_0 = arith.constant 0 : index
    %0 = vector.load %arg1[%c0, %c0_0] : memref<8x128xf32, #tpu.memory_space<vmem>>, vector<8x128xf32>
    %cst = arith.constant 0.000000e+00 : f32
    %1 = vector.broadcast %cst : f32 to vector<8x128xf32>
    %c0_1 = arith.constant 0 : index
    %2 = memref.load %arg2[%c0_1] : memref<32xf32, #tpu.memory_space<smem>>
    %3 = vector.broadcast %2 : f32 to vector<8x128xf32>
    %4 = arith.mulf %3, %0 : vector<8x128xf32>
    %c0_2 = arith.constant 0 : index
    %5 = memref.load %arg3[%c0_2] : memref<32xf32, #tpu.memory_space<smem>>
    %6 = vector.broadcast %5 : f32 to vector<8x128xf32>
    %7 = arith.addf %4, %6 : vector<8x128xf32>
    %cst_3 = arith.constant 0.000000e+00 : f32
    %8 = vector.broadcast %cst_3 : f32 to vector<8x128xf32>
    %9 = arith.maximumf %7, %8 : vector<8x128xf32>
    %c0_4 = arith.constant 0 : index
    %10 = memref.load %arg4[%c0_4] : memref<32xf32, #tpu.memory_space<smem>>
    %11 = vector.broadcast %10 : f32 to vector<8x128xf32>
    %12 = arith.mulf %11, %9 : vector<8x128xf32>
    %13 = arith.addf %1, %12 : vector<8x128xf32>
    %c1 = arith.constant 1 : index
    %14 = memref.load %arg2[%c1] : memref<32xf32, #tpu.memory_space<smem>>
    %15 = vector.broadcast %14 : f32 to vector<8x128xf32>
    %16 = arith.mulf %15, %0 : vector<8x128xf32>
    %c1_5 = arith.constant 1 : index
    %17 = memref.load %arg3[%c1_5] : memref<32xf32, #tpu.memory_space<smem>>
    %18 = vector.broadcast %17 : f32 to vector<8x128xf32>
    %19 = arith.addf %16, %18 : vector<8x128xf32>
    %cst_6 = arith.constant 0.000000e+00 : f32
    %20 = vector.broadcast %cst_6 : f32 to vector<8x128xf32>
    %21 = arith.maximumf %19, %20 : vector<8x128xf32>
    %c1_7 = arith.constant 1 : index
    %22 = memref.load %arg4[%c1_7] : memref<32xf32, #tpu.memory_space<smem>>
    %23 = vector.broadcast %22 : f32 to vector<8x128xf32>
    %24 = arith.mulf %23, %21 : vector<8x128xf32>
    %25 = arith.addf %13, %24 : vector<8x128xf32>
    %c2 = arith.constant 2 : index
    %26 = memref.load %arg2[%c2] : memref<32xf32, #tpu.memory_space<smem>>
    %27 = vector.broadcast %26 : f32 to vector<8x128xf32>
    %28 = arith.mulf %27, %0 : vector<8x128xf32>
    %c2_8 = arith.constant 2 : index
    %29 = memref.load %arg3[%c2_8] : memref<32xf32, #tpu.memory_space<smem>>
    %30 = vector.broadcast %29 : f32 to vector<8x128xf32>
    %31 = arith.addf %28, %30 : vector<8x128xf32>
    %cst_9 = arith.constant 0.000000e+00 : f32
    %32 = vector.broadcast %cst_9 : f32 to vector<8x128xf32>
    %33 = arith.maximumf %31, %32 : vector<8x128xf32>
    %c2_10 = arith.constant 2 : index
    %34 = memref.load %arg4[%c2_10] : memref<32xf32, #tpu.memory_space<smem>>
    %35 = vector.broadcast %34 : f32 to vector<8x128xf32>
    %36 = arith.mulf %35, %33 : vector<8x128xf32>
    %37 = arith.addf %25, %36 : vector<8x128xf32>
    %c3 = arith.constant 3 : index
    %38 = memref.load %arg2[%c3] : memref<32xf32, #tpu.memory_space<smem>>
    %39 = vector.broadcast %38 : f32 to vector<8x128xf32>
    %40 = arith.mulf %39, %0 : vector<8x128xf32>
    %c3_11 = arith.constant 3 : index
    %41 = memref.load %arg3[%c3_11] : memref<32xf32, #tpu.memory_space<smem>>
    %42 = vector.broadcast %41 : f32 to vector<8x128xf32>
    %43 = arith.addf %40, %42 : vector<8x128xf32>
    %cst_12 = arith.constant 0.000000e+00 : f32
    %44 = vector.broadcast %cst_12 : f32 to vector<8x128xf32>
    %45 = arith.maximumf %43, %44 : vector<8x128xf32>
    %c3_13 = arith.constant 3 : index
    %46 = memref.load %arg4[%c3_13] : memref<32xf32, #tpu.memory_space<smem>>
    %47 = vector.broadcast %46 : f32 to vector<8x128xf32>
    %48 = arith.mulf %47, %45 : vector<8x128xf32>
    %49 = arith.addf %37, %48 : vector<8x128xf32>
    %c4 = arith.constant 4 : index
    %50 = memref.load %arg2[%c4] : memref<32xf32, #tpu.memory_space<smem>>
    %51 = vector.broadcast %50 : f32 to vector<8x128xf32>
    %52 = arith.mulf %51, %0 : vector<8x128xf32>
    %c4_14 = arith.constant 4 : index
    %53 = memref.load %arg3[%c4_14] : memref<32xf32, #tpu.memory_space<smem>>
    %54 = vector.broadcast %53 : f32 to vector<8x128xf32>
    %55 = arith.addf %52, %54 : vector<8x128xf32>
    %cst_15 = arith.constant 0.000000e+00 : f32
    %56 = vector.broadcast %cst_15 : f32 to vector<8x128xf32>
    %57 = arith.maximumf %55, %56 : vector<8x128xf32>
    %c4_16 = arith.constant 4 : index
    %58 = memref.load %arg4[%c4_16] : memref<32xf32, #tpu.memory_space<smem>>
    %59 = vector.broadcast %58 : f32 to vector<8x128xf32>
    %60 = arith.mulf %59, %57 : vector<8x128xf32>
    %61 = arith.addf %49, %60 : vector<8x128xf32>
    %c5 = arith.constant 5 : index
    %62 = memref.load %arg2[%c5] : memref<32xf32, #tpu.memory_space<smem>>
    %63 = vector.broadcast %62 : f32 to vector<8x128xf32>
    %64 = arith.mulf %63, %0 : vector<8x128xf32>
    %c5_17 = arith.constant 5 : index
    %65 = memref.load %arg3[%c5_17] : memref<32xf32, #tpu.memory_space<smem>>
    %66 = vector.broadcast %65 : f32 to vector<8x128xf32>
    %67 = arith.addf %64, %66 : vector<8x128xf32>
    %cst_18 = arith.constant 0.000000e+00 : f32
    %68 = vector.broadcast %cst_18 : f32 to vector<8x128xf32>
    %69 = arith.maximumf %67, %68 : vector<8x128xf32>
    %c5_19 = arith.constant 5 : index
    %70 = memref.load %arg4[%c5_19] : memref<32xf32, #tpu.memory_space<smem>>
    %71 = vector.broadcast %70 : f32 to vector<8x128xf32>
    %72 = arith.mulf %71, %69 : vector<8x128xf32>
    %73 = arith.addf %61, %72 : vector<8x128xf32>
    %c6 = arith.constant 6 : index
    %74 = memref.load %arg2[%c6] : memref<32xf32, #tpu.memory_space<smem>>
    %75 = vector.broadcast %74 : f32 to vector<8x128xf32>
    %76 = arith.mulf %75, %0 : vector<8x128xf32>
    %c6_20 = arith.constant 6 : index
    %77 = memref.load %arg3[%c6_20] : memref<32xf32, #tpu.memory_space<smem>>
    %78 = vector.broadcast %77 : f32 to vector<8x128xf32>
    %79 = arith.addf %76, %78 : vector<8x128xf32>
    %cst_21 = arith.constant 0.000000e+00 : f32
    %80 = vector.broadcast %cst_21 : f32 to vector<8x128xf32>
    %81 = arith.maximumf %79, %80 : vector<8x128xf32>
    %c6_22 = arith.constant 6 : index
    %82 = memref.load %arg4[%c6_22] : memref<32xf32, #tpu.memory_space<smem>>
    %83 = vector.broadcast %82 : f32 to vector<8x128xf32>
    %84 = arith.mulf %83, %81 : vector<8x128xf32>
    %85 = arith.addf %73, %84 : vector<8x128xf32>
    %c7 = arith.constant 7 : index
    %86 = memref.load %arg2[%c7] : memref<32xf32, #tpu.memory_space<smem>>
    %87 = vector.broadcast %86 : f32 to vector<8x128xf32>
    %88 = arith.mulf %87, %0 : vector<8x128xf32>
    %c7_23 = arith.constant 7 : index
    %89 = memref.load %arg3[%c7_23] : memref<32xf32, #tpu.memory_space<smem>>
    %90 = vector.broadcast %89 : f32 to vector<8x128xf32>
    %91 = arith.addf %88, %90 : vector<8x128xf32>
    %cst_24 = arith.constant 0.000000e+00 : f32
    %92 = vector.broadcast %cst_24 : f32 to vector<8x128xf32>
    %93 = arith.maximumf %91, %92 : vector<8x128xf32>
    %c7_25 = arith.constant 7 : index
    %94 = memref.load %arg4[%c7_25] : memref<32xf32, #tpu.memory_space<smem>>
    %95 = vector.broadcast %94 : f32 to vector<8x128xf32>
    %96 = arith.mulf %95, %93 : vector<8x128xf32>
    %97 = arith.addf %85, %96 : vector<8x128xf32>
    %c8 = arith.constant 8 : index
    %98 = memref.load %arg2[%c8] : memref<32xf32, #tpu.memory_space<smem>>
    %99 = vector.broadcast %98 : f32 to vector<8x128xf32>
    %100 = arith.mulf %99, %0 : vector<8x128xf32>
    %c8_26 = arith.constant 8 : index
    %101 = memref.load %arg3[%c8_26] : memref<32xf32, #tpu.memory_space<smem>>
    %102 = vector.broadcast %101 : f32 to vector<8x128xf32>
    %103 = arith.addf %100, %102 : vector<8x128xf32>
    %cst_27 = arith.constant 0.000000e+00 : f32
    %104 = vector.broadcast %cst_27 : f32 to vector<8x128xf32>
    %105 = arith.maximumf %103, %104 : vector<8x128xf32>
    %c8_28 = arith.constant 8 : index
    %106 = memref.load %arg4[%c8_28] : memref<32xf32, #tpu.memory_space<smem>>
    %107 = vector.broadcast %106 : f32 to vector<8x128xf32>
    %108 = arith.mulf %107, %105 : vector<8x128xf32>
    %109 = arith.addf %97, %108 : vector<8x128xf32>
    %c9 = arith.constant 9 : index
    %110 = memref.load %arg2[%c9] : memref<32xf32, #tpu.memory_space<smem>>
    %111 = vector.broadcast %110 : f32 to vector<8x128xf32>
    %112 = arith.mulf %111, %0 : vector<8x128xf32>
    %c9_29 = arith.constant 9 : index
    %113 = memref.load %arg3[%c9_29] : memref<32xf32, #tpu.memory_space<smem>>
    %114 = vector.broadcast %113 : f32 to vector<8x128xf32>
    %115 = arith.addf %112, %114 : vector<8x128xf32>
    %cst_30 = arith.constant 0.000000e+00 : f32
    %116 = vector.broadcast %cst_30 : f32 to vector<8x128xf32>
    %117 = arith.maximumf %115, %116 : vector<8x128xf32>
    %c9_31 = arith.constant 9 : index
    %118 = memref.load %arg4[%c9_31] : memref<32xf32, #tpu.memory_space<smem>>
    %119 = vector.broadcast %118 : f32 to vector<8x128xf32>
    %120 = arith.mulf %119, %117 : vector<8x128xf32>
    %121 = arith.addf %109, %120 : vector<8x128xf32>
    %c10 = arith.constant 10 : index
    %122 = memref.load %arg2[%c10] : memref<32xf32, #tpu.memory_space<smem>>
    %123 = vector.broadcast %122 : f32 to vector<8x128xf32>
    %124 = arith.mulf %123, %0 : vector<8x128xf32>
    %c10_32 = arith.constant 10 : index
    %125 = memref.load %arg3[%c10_32] : memref<32xf32, #tpu.memory_space<smem>>
    %126 = vector.broadcast %125 : f32 to vector<8x128xf32>
    %127 = arith.addf %124, %126 : vector<8x128xf32>
    %cst_33 = arith.constant 0.000000e+00 : f32
    %128 = vector.broadcast %cst_33 : f32 to vector<8x128xf32>
    %129 = arith.maximumf %127, %128 : vector<8x128xf32>
    %c10_34 = arith.constant 10 : index
    %130 = memref.load %arg4[%c10_34] : memref<32xf32, #tpu.memory_space<smem>>
    %131 = vector.broadcast %130 : f32 to vector<8x128xf32>
    %132 = arith.mulf %131, %129 : vector<8x128xf32>
    %133 = arith.addf %121, %132 : vector<8x128xf32>
    %c11 = arith.constant 11 : index
    %134 = memref.load %arg2[%c11] : memref<32xf32, #tpu.memory_space<smem>>
    %135 = vector.broadcast %134 : f32 to vector<8x128xf32>
    %136 = arith.mulf %135, %0 : vector<8x128xf32>
    %c11_35 = arith.constant 11 : index
    %137 = memref.load %arg3[%c11_35] : memref<32xf32, #tpu.memory_space<smem>>
    %138 = vector.broadcast %137 : f32 to vector<8x128xf32>
    %139 = arith.addf %136, %138 : vector<8x128xf32>
    %cst_36 = arith.constant 0.000000e+00 : f32
    %140 = vector.broadcast %cst_36 : f32 to vector<8x128xf32>
    %141 = arith.maximumf %139, %140 : vector<8x128xf32>
    %c11_37 = arith.constant 11 : index
    %142 = memref.load %arg4[%c11_37] : memref<32xf32, #tpu.memory_space<smem>>
    %143 = vector.broadcast %142 : f32 to vector<8x128xf32>
    %144 = arith.mulf %143, %141 : vector<8x128xf32>
    %145 = arith.addf %133, %144 : vector<8x128xf32>
    %c12 = arith.constant 12 : index
    %146 = memref.load %arg2[%c12] : memref<32xf32, #tpu.memory_space<smem>>
    %147 = vector.broadcast %146 : f32 to vector<8x128xf32>
    %148 = arith.mulf %147, %0 : vector<8x128xf32>
    %c12_38 = arith.constant 12 : index
    %149 = memref.load %arg3[%c12_38] : memref<32xf32, #tpu.memory_space<smem>>
    %150 = vector.broadcast %149 : f32 to vector<8x128xf32>
    %151 = arith.addf %148, %150 : vector<8x128xf32>
    %cst_39 = arith.constant 0.000000e+00 : f32
    %152 = vector.broadcast %cst_39 : f32 to vector<8x128xf32>
    %153 = arith.maximumf %151, %152 : vector<8x128xf32>
    %c12_40 = arith.constant 12 : index
    %154 = memref.load %arg4[%c12_40] : memref<32xf32, #tpu.memory_space<smem>>
    %155 = vector.broadcast %154 : f32 to vector<8x128xf32>
    %156 = arith.mulf %155, %153 : vector<8x128xf32>
    %157 = arith.addf %145, %156 : vector<8x128xf32>
    %c13 = arith.constant 13 : index
    %158 = memref.load %arg2[%c13] : memref<32xf32, #tpu.memory_space<smem>>
    %159 = vector.broadcast %158 : f32 to vector<8x128xf32>
    %160 = arith.mulf %159, %0 : vector<8x128xf32>
    %c13_41 = arith.constant 13 : index
    %161 = memref.load %arg3[%c13_41] : memref<32xf32, #tpu.memory_space<smem>>
    %162 = vector.broadcast %161 : f32 to vector<8x128xf32>
    %163 = arith.addf %160, %162 : vector<8x128xf32>
    %cst_42 = arith.constant 0.000000e+00 : f32
    %164 = vector.broadcast %cst_42 : f32 to vector<8x128xf32>
    %165 = arith.maximumf %163, %164 : vector<8x128xf32>
    %c13_43 = arith.constant 13 : index
    %166 = memref.load %arg4[%c13_43] : memref<32xf32, #tpu.memory_space<smem>>
    %167 = vector.broadcast %166 : f32 to vector<8x128xf32>
    %168 = arith.mulf %167, %165 : vector<8x128xf32>
    %169 = arith.addf %157, %168 : vector<8x128xf32>
    %c14 = arith.constant 14 : index
    %170 = memref.load %arg2[%c14] : memref<32xf32, #tpu.memory_space<smem>>
    %171 = vector.broadcast %170 : f32 to vector<8x128xf32>
    %172 = arith.mulf %171, %0 : vector<8x128xf32>
    %c14_44 = arith.constant 14 : index
    %173 = memref.load %arg3[%c14_44] : memref<32xf32, #tpu.memory_space<smem>>
    %174 = vector.broadcast %173 : f32 to vector<8x128xf32>
    %175 = arith.addf %172, %174 : vector<8x128xf32>
    %cst_45 = arith.constant 0.000000e+00 : f32
    %176 = vector.broadcast %cst_45 : f32 to vector<8x128xf32>
    %177 = arith.maximumf %175, %176 : vector<8x128xf32>
    %c14_46 = arith.constant 14 : index
    %178 = memref.load %arg4[%c14_46] : memref<32xf32, #tpu.memory_space<smem>>
    %179 = vector.broadcast %178 : f32 to vector<8x128xf32>
    %180 = arith.mulf %179, %177 : vector<8x128xf32>
    %181 = arith.addf %169, %180 : vector<8x128xf32>
    %c15 = arith.constant 15 : index
    %182 = memref.load %arg2[%c15] : memref<32xf32, #tpu.memory_space<smem>>
    %183 = vector.broadcast %182 : f32 to vector<8x128xf32>
    %184 = arith.mulf %183, %0 : vector<8x128xf32>
    %c15_47 = arith.constant 15 : index
    %185 = memref.load %arg3[%c15_47] : memref<32xf32, #tpu.memory_space<smem>>
    %186 = vector.broadcast %185 : f32 to vector<8x128xf32>
    %187 = arith.addf %184, %186 : vector<8x128xf32>
    %cst_48 = arith.constant 0.000000e+00 : f32
    %188 = vector.broadcast %cst_48 : f32 to vector<8x128xf32>
    %189 = arith.maximumf %187, %188 : vector<8x128xf32>
    %c15_49 = arith.constant 15 : index
    %190 = memref.load %arg4[%c15_49] : memref<32xf32, #tpu.memory_space<smem>>
    %191 = vector.broadcast %190 : f32 to vector<8x128xf32>
    %192 = arith.mulf %191, %189 : vector<8x128xf32>
    %193 = arith.addf %181, %192 : vector<8x128xf32>
    %c16 = arith.constant 16 : index
    %194 = memref.load %arg2[%c16] : memref<32xf32, #tpu.memory_space<smem>>
    %195 = vector.broadcast %194 : f32 to vector<8x128xf32>
    %196 = arith.mulf %195, %0 : vector<8x128xf32>
    %c16_50 = arith.constant 16 : index
    %197 = memref.load %arg3[%c16_50] : memref<32xf32, #tpu.memory_space<smem>>
    %198 = vector.broadcast %197 : f32 to vector<8x128xf32>
    %199 = arith.addf %196, %198 : vector<8x128xf32>
    %cst_51 = arith.constant 0.000000e+00 : f32
    %200 = vector.broadcast %cst_51 : f32 to vector<8x128xf32>
    %201 = arith.maximumf %199, %200 : vector<8x128xf32>
    %c16_52 = arith.constant 16 : index
    %202 = memref.load %arg4[%c16_52] : memref<32xf32, #tpu.memory_space<smem>>
    %203 = vector.broadcast %202 : f32 to vector<8x128xf32>
    %204 = arith.mulf %203, %201 : vector<8x128xf32>
    %205 = arith.addf %193, %204 : vector<8x128xf32>
    %c17 = arith.constant 17 : index
    %206 = memref.load %arg2[%c17] : memref<32xf32, #tpu.memory_space<smem>>
    %207 = vector.broadcast %206 : f32 to vector<8x128xf32>
    %208 = arith.mulf %207, %0 : vector<8x128xf32>
    %c17_53 = arith.constant 17 : index
    %209 = memref.load %arg3[%c17_53] : memref<32xf32, #tpu.memory_space<smem>>
    %210 = vector.broadcast %209 : f32 to vector<8x128xf32>
    %211 = arith.addf %208, %210 : vector<8x128xf32>
    %cst_54 = arith.constant 0.000000e+00 : f32
    %212 = vector.broadcast %cst_54 : f32 to vector<8x128xf32>
    %213 = arith.maximumf %211, %212 : vector<8x128xf32>
    %c17_55 = arith.constant 17 : index
    %214 = memref.load %arg4[%c17_55] : memref<32xf32, #tpu.memory_space<smem>>
    %215 = vector.broadcast %214 : f32 to vector<8x128xf32>
    %216 = arith.mulf %215, %213 : vector<8x128xf32>
    %217 = arith.addf %205, %216 : vector<8x128xf32>
    %c18 = arith.constant 18 : index
    %218 = memref.load %arg2[%c18] : memref<32xf32, #tpu.memory_space<smem>>
    %219 = vector.broadcast %218 : f32 to vector<8x128xf32>
    %220 = arith.mulf %219, %0 : vector<8x128xf32>
    %c18_56 = arith.constant 18 : index
    %221 = memref.load %arg3[%c18_56] : memref<32xf32, #tpu.memory_space<smem>>
    %222 = vector.broadcast %221 : f32 to vector<8x128xf32>
    %223 = arith.addf %220, %222 : vector<8x128xf32>
    %cst_57 = arith.constant 0.000000e+00 : f32
    %224 = vector.broadcast %cst_57 : f32 to vector<8x128xf32>
    %225 = arith.maximumf %223, %224 : vector<8x128xf32>
    %c18_58 = arith.constant 18 : index
    %226 = memref.load %arg4[%c18_58] : memref<32xf32, #tpu.memory_space<smem>>
    %227 = vector.broadcast %226 : f32 to vector<8x128xf32>
    %228 = arith.mulf %227, %225 : vector<8x128xf32>
    %229 = arith.addf %217, %228 : vector<8x128xf32>
    %c19 = arith.constant 19 : index
    %230 = memref.load %arg2[%c19] : memref<32xf32, #tpu.memory_space<smem>>
    %231 = vector.broadcast %230 : f32 to vector<8x128xf32>
    %232 = arith.mulf %231, %0 : vector<8x128xf32>
    %c19_59 = arith.constant 19 : index
    %233 = memref.load %arg3[%c19_59] : memref<32xf32, #tpu.memory_space<smem>>
    %234 = vector.broadcast %233 : f32 to vector<8x128xf32>
    %235 = arith.addf %232, %234 : vector<8x128xf32>
    %cst_60 = arith.constant 0.000000e+00 : f32
    %236 = vector.broadcast %cst_60 : f32 to vector<8x128xf32>
    %237 = arith.maximumf %235, %236 : vector<8x128xf32>
    %c19_61 = arith.constant 19 : index
    %238 = memref.load %arg4[%c19_61] : memref<32xf32, #tpu.memory_space<smem>>
    %239 = vector.broadcast %238 : f32 to vector<8x128xf32>
    %240 = arith.mulf %239, %237 : vector<8x128xf32>
    %241 = arith.addf %229, %240 : vector<8x128xf32>
    %c20 = arith.constant 20 : index
    %242 = memref.load %arg2[%c20] : memref<32xf32, #tpu.memory_space<smem>>
    %243 = vector.broadcast %242 : f32 to vector<8x128xf32>
    %244 = arith.mulf %243, %0 : vector<8x128xf32>
    %c20_62 = arith.constant 20 : index
    %245 = memref.load %arg3[%c20_62] : memref<32xf32, #tpu.memory_space<smem>>
    %246 = vector.broadcast %245 : f32 to vector<8x128xf32>
    %247 = arith.addf %244, %246 : vector<8x128xf32>
    %cst_63 = arith.constant 0.000000e+00 : f32
    %248 = vector.broadcast %cst_63 : f32 to vector<8x128xf32>
    %249 = arith.maximumf %247, %248 : vector<8x128xf32>
    %c20_64 = arith.constant 20 : index
    %250 = memref.load %arg4[%c20_64] : memref<32xf32, #tpu.memory_space<smem>>
    %251 = vector.broadcast %250 : f32 to vector<8x128xf32>
    %252 = arith.mulf %251, %249 : vector<8x128xf32>
    %253 = arith.addf %241, %252 : vector<8x128xf32>
    %c21 = arith.constant 21 : index
    %254 = memref.load %arg2[%c21] : memref<32xf32, #tpu.memory_space<smem>>
    %255 = vector.broadcast %254 : f32 to vector<8x128xf32>
    %256 = arith.mulf %255, %0 : vector<8x128xf32>
    %c21_65 = arith.constant 21 : index
    %257 = memref.load %arg3[%c21_65] : memref<32xf32, #tpu.memory_space<smem>>
    %258 = vector.broadcast %257 : f32 to vector<8x128xf32>
    %259 = arith.addf %256, %258 : vector<8x128xf32>
    %cst_66 = arith.constant 0.000000e+00 : f32
    %260 = vector.broadcast %cst_66 : f32 to vector<8x128xf32>
    %261 = arith.maximumf %259, %260 : vector<8x128xf32>
    %c21_67 = arith.constant 21 : index
    %262 = memref.load %arg4[%c21_67] : memref<32xf32, #tpu.memory_space<smem>>
    %263 = vector.broadcast %262 : f32 to vector<8x128xf32>
    %264 = arith.mulf %263, %261 : vector<8x128xf32>
    %265 = arith.addf %253, %264 : vector<8x128xf32>
    %c22 = arith.constant 22 : index
    %266 = memref.load %arg2[%c22] : memref<32xf32, #tpu.memory_space<smem>>
    %267 = vector.broadcast %266 : f32 to vector<8x128xf32>
    %268 = arith.mulf %267, %0 : vector<8x128xf32>
    %c22_68 = arith.constant 22 : index
    %269 = memref.load %arg3[%c22_68] : memref<32xf32, #tpu.memory_space<smem>>
    %270 = vector.broadcast %269 : f32 to vector<8x128xf32>
    %271 = arith.addf %268, %270 : vector<8x128xf32>
    %cst_69 = arith.constant 0.000000e+00 : f32
    %272 = vector.broadcast %cst_69 : f32 to vector<8x128xf32>
    %273 = arith.maximumf %271, %272 : vector<8x128xf32>
    %c22_70 = arith.constant 22 : index
    %274 = memref.load %arg4[%c22_70] : memref<32xf32, #tpu.memory_space<smem>>
    %275 = vector.broadcast %274 : f32 to vector<8x128xf32>
    %276 = arith.mulf %275, %273 : vector<8x128xf32>
    %277 = arith.addf %265, %276 : vector<8x128xf32>
    %c23 = arith.constant 23 : index
    %278 = memref.load %arg2[%c23] : memref<32xf32, #tpu.memory_space<smem>>
    %279 = vector.broadcast %278 : f32 to vector<8x128xf32>
    %280 = arith.mulf %279, %0 : vector<8x128xf32>
    %c23_71 = arith.constant 23 : index
    %281 = memref.load %arg3[%c23_71] : memref<32xf32, #tpu.memory_space<smem>>
    %282 = vector.broadcast %281 : f32 to vector<8x128xf32>
    %283 = arith.addf %280, %282 : vector<8x128xf32>
    %cst_72 = arith.constant 0.000000e+00 : f32
    %284 = vector.broadcast %cst_72 : f32 to vector<8x128xf32>
    %285 = arith.maximumf %283, %284 : vector<8x128xf32>
    %c23_73 = arith.constant 23 : index
    %286 = memref.load %arg4[%c23_73] : memref<32xf32, #tpu.memory_space<smem>>
    %287 = vector.broadcast %286 : f32 to vector<8x128xf32>
    %288 = arith.mulf %287, %285 : vector<8x128xf32>
    %289 = arith.addf %277, %288 : vector<8x128xf32>
    %c24 = arith.constant 24 : index
    %290 = memref.load %arg2[%c24] : memref<32xf32, #tpu.memory_space<smem>>
    %291 = vector.broadcast %290 : f32 to vector<8x128xf32>
    %292 = arith.mulf %291, %0 : vector<8x128xf32>
    %c24_74 = arith.constant 24 : index
    %293 = memref.load %arg3[%c24_74] : memref<32xf32, #tpu.memory_space<smem>>
    %294 = vector.broadcast %293 : f32 to vector<8x128xf32>
    %295 = arith.addf %292, %294 : vector<8x128xf32>
    %cst_75 = arith.constant 0.000000e+00 : f32
    %296 = vector.broadcast %cst_75 : f32 to vector<8x128xf32>
    %297 = arith.maximumf %295, %296 : vector<8x128xf32>
    %c24_76 = arith.constant 24 : index
    %298 = memref.load %arg4[%c24_76] : memref<32xf32, #tpu.memory_space<smem>>
    %299 = vector.broadcast %298 : f32 to vector<8x128xf32>
    %300 = arith.mulf %299, %297 : vector<8x128xf32>
    %301 = arith.addf %289, %300 : vector<8x128xf32>
    %c25 = arith.constant 25 : index
    %302 = memref.load %arg2[%c25] : memref<32xf32, #tpu.memory_space<smem>>
    %303 = vector.broadcast %302 : f32 to vector<8x128xf32>
    %304 = arith.mulf %303, %0 : vector<8x128xf32>
    %c25_77 = arith.constant 25 : index
    %305 = memref.load %arg3[%c25_77] : memref<32xf32, #tpu.memory_space<smem>>
    %306 = vector.broadcast %305 : f32 to vector<8x128xf32>
    %307 = arith.addf %304, %306 : vector<8x128xf32>
    %cst_78 = arith.constant 0.000000e+00 : f32
    %308 = vector.broadcast %cst_78 : f32 to vector<8x128xf32>
    %309 = arith.maximumf %307, %308 : vector<8x128xf32>
    %c25_79 = arith.constant 25 : index
    %310 = memref.load %arg4[%c25_79] : memref<32xf32, #tpu.memory_space<smem>>
    %311 = vector.broadcast %310 : f32 to vector<8x128xf32>
    %312 = arith.mulf %311, %309 : vector<8x128xf32>
    %313 = arith.addf %301, %312 : vector<8x128xf32>
    %c26 = arith.constant 26 : index
    %314 = memref.load %arg2[%c26] : memref<32xf32, #tpu.memory_space<smem>>
    %315 = vector.broadcast %314 : f32 to vector<8x128xf32>
    %316 = arith.mulf %315, %0 : vector<8x128xf32>
    %c26_80 = arith.constant 26 : index
    %317 = memref.load %arg3[%c26_80] : memref<32xf32, #tpu.memory_space<smem>>
    %318 = vector.broadcast %317 : f32 to vector<8x128xf32>
    %319 = arith.addf %316, %318 : vector<8x128xf32>
    %cst_81 = arith.constant 0.000000e+00 : f32
    %320 = vector.broadcast %cst_81 : f32 to vector<8x128xf32>
    %321 = arith.maximumf %319, %320 : vector<8x128xf32>
    %c26_82 = arith.constant 26 : index
    %322 = memref.load %arg4[%c26_82] : memref<32xf32, #tpu.memory_space<smem>>
    %323 = vector.broadcast %322 : f32 to vector<8x128xf32>
    %324 = arith.mulf %323, %321 : vector<8x128xf32>
    %325 = arith.addf %313, %324 : vector<8x128xf32>
    %c27 = arith.constant 27 : index
    %326 = memref.load %arg2[%c27] : memref<32xf32, #tpu.memory_space<smem>>
    %327 = vector.broadcast %326 : f32 to vector<8x128xf32>
    %328 = arith.mulf %327, %0 : vector<8x128xf32>
    %c27_83 = arith.constant 27 : index
    %329 = memref.load %arg3[%c27_83] : memref<32xf32, #tpu.memory_space<smem>>
    %330 = vector.broadcast %329 : f32 to vector<8x128xf32>
    %331 = arith.addf %328, %330 : vector<8x128xf32>
    %cst_84 = arith.constant 0.000000e+00 : f32
    %332 = vector.broadcast %cst_84 : f32 to vector<8x128xf32>
    %333 = arith.maximumf %331, %332 : vector<8x128xf32>
    %c27_85 = arith.constant 27 : index
    %334 = memref.load %arg4[%c27_85] : memref<32xf32, #tpu.memory_space<smem>>
    %335 = vector.broadcast %334 : f32 to vector<8x128xf32>
    %336 = arith.mulf %335, %333 : vector<8x128xf32>
    %337 = arith.addf %325, %336 : vector<8x128xf32>
    %c28 = arith.constant 28 : index
    %338 = memref.load %arg2[%c28] : memref<32xf32, #tpu.memory_space<smem>>
    %339 = vector.broadcast %338 : f32 to vector<8x128xf32>
    %340 = arith.mulf %339, %0 : vector<8x128xf32>
    %c28_86 = arith.constant 28 : index
    %341 = memref.load %arg3[%c28_86] : memref<32xf32, #tpu.memory_space<smem>>
    %342 = vector.broadcast %341 : f32 to vector<8x128xf32>
    %343 = arith.addf %340, %342 : vector<8x128xf32>
    %cst_87 = arith.constant 0.000000e+00 : f32
    %344 = vector.broadcast %cst_87 : f32 to vector<8x128xf32>
    %345 = arith.maximumf %343, %344 : vector<8x128xf32>
    %c28_88 = arith.constant 28 : index
    %346 = memref.load %arg4[%c28_88] : memref<32xf32, #tpu.memory_space<smem>>
    %347 = vector.broadcast %346 : f32 to vector<8x128xf32>
    %348 = arith.mulf %347, %345 : vector<8x128xf32>
    %349 = arith.addf %337, %348 : vector<8x128xf32>
    %c29 = arith.constant 29 : index
    %350 = memref.load %arg2[%c29] : memref<32xf32, #tpu.memory_space<smem>>
    %351 = vector.broadcast %350 : f32 to vector<8x128xf32>
    %352 = arith.mulf %351, %0 : vector<8x128xf32>
    %c29_89 = arith.constant 29 : index
    %353 = memref.load %arg3[%c29_89] : memref<32xf32, #tpu.memory_space<smem>>
    %354 = vector.broadcast %353 : f32 to vector<8x128xf32>
    %355 = arith.addf %352, %354 : vector<8x128xf32>
    %cst_90 = arith.constant 0.000000e+00 : f32
    %356 = vector.broadcast %cst_90 : f32 to vector<8x128xf32>
    %357 = arith.maximumf %355, %356 : vector<8x128xf32>
    %c29_91 = arith.constant 29 : index
    %358 = memref.load %arg4[%c29_91] : memref<32xf32, #tpu.memory_space<smem>>
    %359 = vector.broadcast %358 : f32 to vector<8x128xf32>
    %360 = arith.mulf %359, %357 : vector<8x128xf32>
    %361 = arith.addf %349, %360 : vector<8x128xf32>
    %c30 = arith.constant 30 : index
    %362 = memref.load %arg2[%c30] : memref<32xf32, #tpu.memory_space<smem>>
    %363 = vector.broadcast %362 : f32 to vector<8x128xf32>
    %364 = arith.mulf %363, %0 : vector<8x128xf32>
    %c30_92 = arith.constant 30 : index
    %365 = memref.load %arg3[%c30_92] : memref<32xf32, #tpu.memory_space<smem>>
    %366 = vector.broadcast %365 : f32 to vector<8x128xf32>
    %367 = arith.addf %364, %366 : vector<8x128xf32>
    %cst_93 = arith.constant 0.000000e+00 : f32
    %368 = vector.broadcast %cst_93 : f32 to vector<8x128xf32>
    %369 = arith.maximumf %367, %368 : vector<8x128xf32>
    %c30_94 = arith.constant 30 : index
    %370 = memref.load %arg4[%c30_94] : memref<32xf32, #tpu.memory_space<smem>>
    %371 = vector.broadcast %370 : f32 to vector<8x128xf32>
    %372 = arith.mulf %371, %369 : vector<8x128xf32>
    %373 = arith.addf %361, %372 : vector<8x128xf32>
    %c31 = arith.constant 31 : index
    %374 = memref.load %arg2[%c31] : memref<32xf32, #tpu.memory_space<smem>>
    %375 = vector.broadcast %374 : f32 to vector<8x128xf32>
    %376 = arith.mulf %375, %0 : vector<8x128xf32>
    %c31_95 = arith.constant 31 : index
    %377 = memref.load %arg3[%c31_95] : memref<32xf32, #tpu.memory_space<smem>>
    %378 = vector.broadcast %377 : f32 to vector<8x128xf32>
    %379 = arith.addf %376, %378 : vector<8x128xf32>
    %cst_96 = arith.constant 0.000000e+00 : f32
    %380 = vector.broadcast %cst_96 : f32 to vector<8x128xf32>
    %381 = arith.maximumf %379, %380 : vector<8x128xf32>
    %c31_97 = arith.constant 31 : index
    %382 = memref.load %arg4[%c31_97] : memref<32xf32, #tpu.memory_space<smem>>
    %383 = vector.broadcast %382 : f32 to vector<8x128xf32>
    %384 = arith.mulf %383, %381 : vector<8x128xf32>
    %385 = arith.addf %373, %384 : vector<8x128xf32>
    %c0_98 = arith.constant 0 : index
    %386 = memref.load %arg5[%c0_98] : memref<1xf32, #tpu.memory_space<smem>>
    %387 = vector.broadcast %386 : f32 to vector<8x128xf32>
    %388 = arith.addf %385, %387 : vector<8x128xf32>
    %cst_99 = arith.constant 0.000000e+00 : f32
    %389 = vector.broadcast %cst_99 : f32 to vector<8x128xf32>
    %390 = arith.maximumf %388, %389 : vector<8x128xf32>
    %c0_100 = arith.constant 0 : index
    %c0_101 = arith.constant 0 : index
    %391 = vector.load %arg6[%c0_100, %c0_101] : memref<8x128xf32, #tpu.memory_space<vmem>>, vector<8x128xf32>
    tpu.vector_store %arg6[%c0_100, %c0_101], %390 {strides = array<i32>} : memref<8x128xf32, #tpu.memory_space<vmem>>, vector<8x128xf32>,
    return
  }
  func.func @transform_0(%arg0: i32) -> (i32, i32) {
    %c0_i32 = arith.constant 0 : i32
    %c0_i32_0 = arith.constant 0 : i32
    return %arg0, %c0_i32 : i32, i32
  }
  func.func @transform_1(%arg0: i32) -> i32 {
    %c0_i32 = arith.constant 0 : i32
    %c0_i32_0 = arith.constant 0 : i32
    return %c0_i32 : i32
  }
  func.func @transform_2(%arg0: i32) -> i32 {
    %c0_i32 = arith.constant 0 : i32
    %c0_i32_0 = arith.constant 0 : i32
    return %c0_i32 : i32
  }
  func.func @transform_3(%arg0: i32) -> i32 {
    %c0_i32 = arith.constant 0 : i32
    %c0_i32_0 = arith.constant 0 : i32
    return %c0_i32 : i32
  }
  func.func @transform_4(%arg0: i32) -> i32 {
    %c0_i32 = arith.constant 0 : i32
    %c0_i32_0 = arith.constant 0 : i32
    return %c0_i32 : i32
  }
  func.func @transform_5(%arg0: i32) -> (i32, i32) {
    %c0_i32 = arith.constant 0 : i32
    %c0_i32_0 = arith.constant 0 : i32
    return %arg0, %c0_i32 : i32, i32
  }
}

</mosaic_0001>

<llo_original>
// kernel: tpu_custom_call.1
$region0: #{tpu_custom_call.1}
  #allocation0 [shape = 'u32[]', space=smem, size = 0x4, offset = 0x4, fixed_abs, tag = 'smem constant byte address 0x4 - core index']
  #allocation1 [shape = 'u32[72,128]{1,0:T(1,128)}', space=vmem, size = 0x9000, scoped, tag = 'internal scratch']
  #allocation2 [shape = 'f32[1]{0:T(128)S(6)}', space=smem, size = 0x200, scoped, tag = 'scoped memory for tpu_custom_call.1']
  %s0 = inlined_call_operand.hbm [shape: f32[8,128], index: 0, kind: input, shape index: {}]
  %s1 = inlined_call_operand.vmem [shape: f32[32], index: 1, kind: input, shape index: {}]
  %s2 = inlined_call_operand.vmem [shape: f32[32], index: 2, kind: input, shape index: {}]
  %s3 = inlined_call_operand.vmem [shape: f32[32], index: 3, kind: input, shape index: {}]
  %s4 = inlined_call_operand.<no memory space> [shape: f32[1], index: 4, kind: input, shape index: {}]
  %s5 = inlined_call_operand.hbm [shape: f32[8,128], index: 5, kind: output, shape index: {}]
  %s6 = sld [smem:[#allocation0]]
  $region46: #{tpu_custom_call.1} parent=0
    _
  %s8 = ssub.s32 1, %s6
  %s9 = scalar_select 0, %s8, %s6
  %10 = sst [smem:[#allocation2]] %s4
  $region1: #{tpu_custom_call.1} parent=0
    #allocation3 [shape = 'u8[4096]{0}', space=vmem, size = 0x1000, scoped, tag = 'input window, operand 0, single buffered']
    #allocation4 [shape = 's32[1]{0}', space=sflag, size = 0x4, scoped, tag = 'scoped memory for tpu_custom_call.1']
    #allocation5 [shape = 's32[1]{0}', space=sflag, size = 0x4, scoped, tag = 'scoped memory for tpu_custom_call.1']
    #allocation6 [shape = 's32[1]{0}', space=sflag, size = 0x4, scoped, tag = 'scoped memory for tpu_custom_call.1']
    #allocation7 [shape = 'u8[512]{0}', space=smem, size = 0x200, scoped, tag = 'input window, operand 1, single buffered']
    #allocation8 [shape = 'u8[512]{0}', space=smem, size = 0x200, scoped, tag = 'input window, operand 2, single buffered']
    #allocation9 [shape = 's32[1]{0}', space=sflag, size = 0x4, scoped, tag = 'scoped memory for tpu_custom_call.1']
    #allocation10 [shape = 'u8[512]{0}', space=smem, size = 0x200, scoped, tag = 'input window, operand 3, single buffered']
    #allocation11 [shape = 'u8[4096]{0}', space=vmem, size = 0x1000, scoped, tag = 'output window, operand 0, single buffered']
    %11 = vsyncpa [#allocation4], 0
    %12 = vsyncpa [#allocation6], 0
    %13 = vsyncpa [#allocation9], 0
    %14 = vsyncpa [#allocation5], 0
    // Predicated region
    $region2: #{tpu_custom_call.1} parent=1 // pred_check
      _
    $region3: #{tpu_custom_call.1} parent=1 // pred_check_branch
      %16 = sbr.rel (0) target = $region5
    $region4: #{tpu_custom_call.1} parent=1 // pred_region
      %18 = vsyncadd [#allocation4], 0
      %s20 = sshll.u32 %s0, 4
      %s21 = int_to_ptr.hbm [resolvable:$true] %s20
      %s22 = sshll.u32 [#allocation3], 4
      %s23 = int_to_ptr.vmem [resolvable:$true] %s22
      %25 = dma.hbm_to_vmem [thread:$0]  %s21, 128, %s23, [#allocation4]
    $region5: #{tpu_custom_call.1} parent=1 // pred_fallthru
      _
    // Predicated region
    $region6: #{tpu_custom_call.1} parent=1 // pred_check
      _
    $region7: #{tpu_custom_call.1} parent=1 // pred_check_branch
      %27 = sbr.rel (0) target = $region9
    $region8: #{tpu_custom_call.1} parent=1 // pred_region
      %29 = vsyncadd [#allocation6], 0
      %s31 = sshll.u32 %s1, 4
      %s32 = int_to_ptr.vmem [resolvable:$true] %s31
      %34 = dma.vmem_to_smem %s32, 16, [#allocation7], [#allocation6]
    $region9: #{tpu_custom_call.1} parent=1 // pred_fallthru
      _
    // Predicated region
    $region10: #{tpu_custom_call.1} parent=1 // pred_check
      _
    $region11: #{tpu_custom_call.1} parent=1 // pred_check_branch
      %36 = sbr.rel (0) target = $region13
    $region12: #{tpu_custom_call.1} parent=1 // pred_region
      %38 = vsyncadd [#allocation9], 0
      %s40 = sshll.u32 %s2, 4
      %s41 = int_to_ptr.vmem [resolvable:$true] %s40
      %43 = dma.vmem_to_smem %s41, 16, [#allocation8], [#allocation9]
    $region13: #{tpu_custom_call.1} parent=1 // pred_fallthru
      _
    // Predicated region
    $region14: #{tpu_custom_call.1} parent=1 // pred_check
      _
    $region15: #{tpu_custom_call.1} parent=1 // pred_check_branch
      %45 = sbr.rel (0) target = $region17
    $region16: #{tpu_custom_call.1} parent=1 // pred_region
      %47 = vsyncadd [#allocation9], 0
      %s49 = sshll.u32 %s3, 4
      %s50 = int_to_ptr.vmem [resolvable:$true] %s49
      %52 = dma.vmem_to_smem %s50, 16, [#allocation10], [#allocation9]
    $region17: #{tpu_custom_call.1} parent=1 // pred_fallthru
      _
    // Predicated region
    $region18: #{tpu_custom_call.1} parent=1 // pred_check
      _
    $region19: #{tpu_custom_call.1} parent=1 // pred_check_branch
      %54 = sbr.rel (0) target = $region21
    $region20: #{tpu_custom_call.1} parent=1 // pred_region
      _
    $region21: #{tpu_custom_call.1} parent=1 // pred_fallthru
      _
    // Predicated region
    $region22: #{tpu_custom_call.1} parent=1 // pred_check
      _
    $region23: #{tpu_custom_call.1} parent=1 // pred_check_branch
      %56 = sbr.rel (0) target = $region25
    $region24: #{tpu_custom_call.1} parent=1 // pred_region
      %58 = dma.done [#allocation4], 128
    $region25: #{tpu_custom_call.1} parent=1 // pred_fallthru
      _
    // Predicated region
    $region26: #{tpu_custom_call.1} parent=1 // pred_check
      _
    $region27: #{tpu_custom_call.1} parent=1 // pred_check_branch
      %60 = sbr.rel (0) target = $region29
    $region28: #{tpu_custom_call.1} parent=1 // pred_region
      %62 = dma.done [#allocation6], 16
    $region29: #{tpu_custom_call.1} parent=1 // pred_fallthru
      _
    // Predicated region
    $region30: #{tpu_custom_call.1} parent=1 // pred_check
      _
    $region31: #{tpu_custom_call.1} parent=1 // pred_check_branch
      %64 = sbr.rel (0) target = $region33
    $region32: #{tpu_custom_call.1} parent=1 // pred_region
      %66 = dma.done [#allocation9], 16
    $region33: #{tpu_custom_call.1} parent=1 // pred_fallthru
      _
    // Predicated region
    $region34: #{tpu_custom_call.1} parent=1 // pred_check
      _
    $region35: #{tpu_custom_call.1} parent=1 // pred_check_branch
      %68 = sbr.rel (0) target = $region37
    $region36: #{tpu_custom_call.1} parent=1 // pred_region
      %70 = dma.done [#allocation9], 16
    $region37: #{tpu_custom_call.1} parent=1 // pred_fallthru
      _
    %71 = sfence
    %v72 = vld [vmem:[#allocation3] sm:$0xff]
    %s73 = sld [smem:[#allocation7]]
    %v74 = vstv %s73
    %v75 = vmul.f32 %v74, %v72
    %s76 = sld [smem:[#allocation8]]
    %v77 = vstv %s76
    %v78 = vadd.f32 %v75, %v77
    %v79 = vmax.f32 %v78, 0.0
    %s80 = sld [smem:[#allocation10]]
    %v81 = vstv %s80
    %v82 = vmul.f32 %v81, %v79
    %v83 = vadd.f32 %v82, 0.0
    %s84 = sld [smem:[#allocation7 + $0x1]]
    %v85 = vstv %s84
    %v86 = vmul.f32 %v85, %v72
    %s87 = sld [smem:[#allocation8 + $0x1]]
    %v88 = vstv %s87
    %v89 = vadd.f32 %v86, %v88
    %v90 = vmax.f32 %v89, 0.0
    %s91 = sld [smem:[#allocation10 + $0x1]]
    %v92 = vstv %s91
    %v93 = vmul.f32 %v92, %v90
    %v94 = vadd.f32 %v83, %v93
    %s95 = sld [smem:[#allocation7 + $0x2]]
    %v96 = vstv %s95
    %v97 = vmul.f32 %v96, %v72
    %s98 = sld [smem:[#allocation8 + $0x2]]
    %v99 = vstv %s98
    %v100 = vadd.f32 %v97, %v99
    %v101 = vmax.f32 %v100, 0.0
    %s102 = sld [smem:[#allocation10 + $0x2]]
    %v103 = vstv %s102
    %v104 = vmul.f32 %v103, %v101
    %v105 = vadd.f32 %v94, %v104
    %s106 = sld [smem:[#allocation7 + $0x3]]
    %v107 = vstv %s106
    %v108 = vmul.f32 %v107, %v72
    %s109 = sld [smem:[#allocation8 + $0x3]]
    %v110 = vstv %s109
    %v111 = vadd.f32 %v108, %v110
    %v112 = vmax.f32 %v111, 0.0
    %s113 = sld [smem:[#allocation10 + $0x3]]
    %v114 = vstv %s113
    %v115 = vmul.f32 %v114, %v112
    %v116 = vadd.f32 %v105, %v115
    %s117 = sld [smem:[#allocation7 + $0x4]]
    %v118 = vstv %s117
    %v119 = vmul.f32 %v118, %v72
    %s120 = sld [smem:[#allocation8 + $0x4]]
    %v121 = vstv %s120
    %v122 = vadd.f32 %v119, %v121
    %v123 = vmax.f32 %v122, 0.0
    %s124 = sld [smem:[#allocation10 + $0x4]]
    %v125 = vstv %s124
    %v126 = vmul.f32 %v125, %v123
    %v127 = vadd.f32 %v116, %v126
    %s128 = sld [smem:[#allocation7 + $0x5]]
    %v129 = vstv %s128
    %v130 = vmul.f32 %v129, %v72
    %s131 = sld [smem:[#allocation8 + $0x5]]
    %v132 = vstv %s131
    %v133 = vadd.f32 %v130, %v132
    %v134 = vmax.f32 %v133, 0.0
    %s135 = sld [smem:[#allocation10 + $0x5]]
    %v136 = vstv %s135
    %v137 = vmul.f32 %v136, %v134
    %v138 = vadd.f32 %v127, %v137
    %s139 = sld [smem:[#allocation7 + $0x6]]
    %v140 = vstv %s139
    %v141 = vmul.f32 %v140, %v72
    %s142 = sld [smem:[#allocation8 + $0x6]]
    %v143 = vstv %s142
    %v144 = vadd.f32 %v141, %v143
    %v145 = vmax.f32 %v144, 0.0
    %s146 = sld [smem:[#allocation10 + $0x6]]
    %v147 = vstv %s146
    %v148 = vmul.f32 %v147, %v145
    %v149 = vadd.f32 %v138, %v148
    %s150 = sld [smem:[#allocation7 + $0x7]]
    %v151 = vstv %s150
    %v152 = vmul.f32 %v151, %v72
    %s153 = sld [smem:[#allocation8 + $0x7]]
    %v154 = vstv %s153
    %v155 = vadd.f32 %v152, %v154
    %v156 = vmax.f32 %v155, 0.0
    %s157 = sld [smem:[#allocation10 + $0x7]]
    %v158 = vstv %s157
    %v159 = vmul.f32 %v158, %v156
    %v160 = vadd.f32 %v149, %v159
    %s161 = sld [smem:[#allocation7 + $0x8]]
    %v162 = vstv %s161
    %v163 = vmul.f32 %v162, %v72
    %s164 = sld [smem:[#allocation8 + $0x8]]
    %v165 = vstv %s164
    %v166 = vadd.f32 %v163, %v165
    %v167 = vmax.f32 %v166, 0.0
    %s168 = sld [smem:[#allocation10 + $0x8]]
    %v169 = vstv %s168
    %v170 = vmul.f32 %v169, %v167
    %v171 = vadd.f32 %v160, %v170
    %s172 = sld [smem:[#allocation7 + $0x9]]
    %v173 = vstv %s172
    %v174 = vmul.f32 %v173, %v72
    %s175 = sld [smem:[#allocation8 + $0x9]]
    %v176 = vstv %s175
    %v177 = vadd.f32 %v174, %v176
    %v178 = vmax.f32 %v177, 0.0
    %s179 = sld [smem:[#allocation10 + $0x9]]
    %v180 = vstv %s179
    %v181 = vmul.f32 %v180, %v178
    %v182 = vadd.f32 %v171, %v181
    %s183 = sld [smem:[#allocation7 + $0xa]]
    %v184 = vstv %s183
    %v185 = vmul.f32 %v184, %v72
    %s186 = sld [smem:[#allocation8 + $0xa]]
    %v187 = vstv %s186
    %v188 = vadd.f32 %v185, %v187
    %v189 = vmax.f32 %v188, 0.0
    %s190 = sld [smem:[#allocation10 + $0xa]]
    %v191 = vstv %s190
    %v192 = vmul.f32 %v191, %v189
    %v193 = vadd.f32 %v182, %v192
    %s194 = sld [smem:[#allocation7 + $0xb]]
    %v195 = vstv %s194
    %v196 = vmul.f32 %v195, %v72
    %s197 = sld [smem:[#allocation8 + $0xb]]
    %v198 = vstv %s197
    %v199 = vadd.f32 %v196, %v198
    %v200 = vmax.f32 %v199, 0.0
    %s201 = sld [smem:[#allocation10 + $0xb]]
    %v202 = vstv %s201
    %v203 = vmul.f32 %v202, %v200
    %v204 = vadd.f32 %v193, %v203
    %s205 = sld [smem:[#allocation7 + $0xc]]
    %v206 = vstv %s205
    %v207 = vmul.f32 %v206, %v72
    %s208 = sld [smem:[#allocation8 + $0xc]]
    %v209 = vstv %s208
    %v210 = vadd.f32 %v207, %v209
    %v211 = vmax.f32 %v210, 0.0
    %s212 = sld [smem:[#allocation10 + $0xc]]
    %v213 = vstv %s212
    %v214 = vmul.f32 %v213, %v211
    %v215 = vadd.f32 %v204, %v214
    %s216 = sld [smem:[#allocation7 + $0xd]]
    %v217 = vstv %s216
    %v218 = vmul.f32 %v217, %v72
    %s219 = sld [smem:[#allocation8 + $0xd]]
    %v220 = vstv %s219
    %v221 = vadd.f32 %v218, %v220
    %v222 = vmax.f32 %v221, 0.0
    %s223 = sld [smem:[#allocation10 + $0xd]]
    %v224 = vstv %s223
    %v225 = vmul.f32 %v224, %v222
    %v226 = vadd.f32 %v215, %v225
    %s227 = sld [smem:[#allocation7 + $0xe]]
    %v228 = vstv %s227
    %v229 = vmul.f32 %v228, %v72
    %s230 = sld [smem:[#allocation8 + $0xe]]
    %v231 = vstv %s230
    %v232 = vadd.f32 %v229, %v231
    %v233 = vmax.f32 %v232, 0.0
    %s234 = sld [smem:[#allocation10 + $0xe]]
    %v235 = vstv %s234
    %v236 = vmul.f32 %v235, %v233
    %v237 = vadd.f32 %v226, %v236
    %s238 = sld [smem:[#allocation7 + $0xf]]
    %v239 = vstv %s238
    %v240 = vmul.f32 %v239, %v72
    %s241 = sld [smem:[#allocation8 + $0xf]]
    %v242 = vstv %s241
    %v243 = vadd.f32 %v240, %v242
    %v244 = vmax.f32 %v243, 0.0
    %s245 = sld [smem:[#allocation10 + $0xf]]
    %v246 = vstv %s245
    %v247 = vmul.f32 %v246, %v244
    %v248 = vadd.f32 %v237, %v247
    %s249 = sld [smem:[#allocation7 + $0x10]]
    %v250 = vstv %s249
    %v251 = vmul.f32 %v250, %v72
    %s252 = sld [smem:[#allocation8 + $0x10]]
    %v253 = vstv %s252
    %v254 = vadd.f32 %v251, %v253
    %v255 = vmax.f32 %v254, 0.0
    %s256 = sld [smem:[#allocation10 + $0x10]]
    %v257 = vstv %s256
    %v258 = vmul.f32 %v257, %v255
    %v259 = vadd.f32 %v248, %v258
    %s260 = sld [smem:[#allocation7 + $0x11]]
    %v261 = vstv %s260
    %v262 = vmul.f32 %v261, %v72
    %s263 = sld [smem:[#allocation8 + $0x11]]
    %v264 = vstv %s263
    %v265 = vadd.f32 %v262, %v264
    %v266 = vmax.f32 %v265, 0.0
    %s267 = sld [smem:[#allocation10 + $0x11]]
    %v268 = vstv %s267
    %v269 = vmul.f32 %v268, %v266
    %v270 = vadd.f32 %v259, %v269
    %s271 = sld [smem:[#allocation7 + $0x12]]
    %v272 = vstv %s271
    %v273 = vmul.f32 %v272, %v72
    %s274 = sld [smem:[#allocation8 + $0x12]]
    %v275 = vstv %s274
    %v276 = vadd.f32 %v273, %v275
    %v277 = vmax.f32 %v276, 0.0
    %s278 = sld [smem:[#allocation10 + $0x12]]
    %v279 = vstv %s278
    %v280 = vmul.f32 %v279, %v277
    %v281 = vadd.f32 %v270, %v280
    %s282 = sld [smem:[#allocation7 + $0x13]]
    %v283 = vstv %s282
    %v284 = vmul.f32 %v283, %v72
    %s285 = sld [smem:[#allocation8 + $0x13]]
    %v286 = vstv %s285
    %v287 = vadd.f32 %v284, %v286
    %v288 = vmax.f32 %v287, 0.0
    %s289 = sld [smem:[#allocation10 + $0x13]]
    %v290 = vstv %s289
    %v291 = vmul.f32 %v290, %v288
    %v292 = vadd.f32 %v281, %v291
    %s293 = sld [smem:[#allocation7 + $0x14]]
    %v294 = vstv %s293
    %v295 = vmul.f32 %v294, %v72
    %s296 = sld [smem:[#allocation8 + $0x14]]
    %v297 = vstv %s296
    %v298 = vadd.f32 %v295, %v297
    %v299 = vmax.f32 %v298, 0.0
    %s300 = sld [smem:[#allocation10 + $0x14]]
    %v301 = vstv %s300
    %v302 = vmul.f32 %v301, %v299
    %v303 = vadd.f32 %v292, %v302
    %s304 = sld [smem:[#allocation7 + $0x15]]
    %v305 = vstv %s304
    %v306 = vmul.f32 %v305, %v72
    %s307 = sld [smem:[#allocation8 + $0x15]]
    %v308 = vstv %s307
    %v309 = vadd.f32 %v306, %v308
    %v310 = vmax.f32 %v309, 0.0
    %s311 = sld [smem:[#allocation10 + $0x15]]
    %v312 = vstv %s311
    %v313 = vmul.f32 %v312, %v310
    %v314 = vadd.f32 %v303, %v313
    %s315 = sld [smem:[#allocation7 + $0x16]]
    %v316 = vstv %s315
    %v317 = vmul.f32 %v316, %v72
    %s318 = sld [smem:[#allocation8 + $0x16]]
    %v319 = vstv %s318
    %v320 = vadd.f32 %v317, %v319
    %v321 = vmax.f32 %v320, 0.0
    %s322 = sld [smem:[#allocation10 + $0x16]]
    %v323 = vstv %s322
    %v324 = vmul.f32 %v323, %v321
    %v325 = vadd.f32 %v314, %v324
    %s326 = sld [smem:[#allocation7 + $0x17]]
    %v327 = vstv %s326
    %v328 = vmul.f32 %v327, %v72
    %s329 = sld [smem:[#allocation8 + $0x17]]
    %v330 = vstv %s329
    %v331 = vadd.f32 %v328, %v330
    %v332 = vmax.f32 %v331, 0.0
    %s333 = sld [smem:[#allocation10 + $0x17]]
    %v334 = vstv %s333
    %v335 = vmul.f32 %v334, %v332
    %v336 = vadd.f32 %v325, %v335
    %s337 = sld [smem:[#allocation7 + $0x18]]
    %v338 = vstv %s337
    %v339 = vmul.f32 %v338, %v72
    %s340 = sld [smem:[#allocation8 + $0x18]]
    %v341 = vstv %s340
    %v342 = vadd.f32 %v339, %v341
    %v343 = vmax.f32 %v342, 0.0
    %s344 = sld [smem:[#allocation10 + $0x18]]
    %v345 = vstv %s344
    %v346 = vmul.f32 %v345, %v343
    %v347 = vadd.f32 %v336, %v346
    %s348 = sld [smem:[#allocation7 + $0x19]]
    %v349 = vstv %s348
    %v350 = vmul.f32 %v349, %v72
    %s351 = sld [smem:[#allocation8 + $0x19]]
    %v352 = vstv %s351
    %v353 = vadd.f32 %v350, %v352
    %v354 = vmax.f32 %v353, 0.0
    %s355 = sld [smem:[#allocation10 + $0x19]]
    %v356 = vstv %s355
    %v357 = vmul.f32 %v356, %v354
    %v358 = vadd.f32 %v347, %v357
    %s359 = sld [smem:[#allocation7 + $0x1a]]
    %v360 = vstv %s359
    %v361 = vmul.f32 %v360, %v72
    %s362 = sld [smem:[#allocation8 + $0x1a]]
    %v363 = vstv %s362
    %v364 = vadd.f32 %v361, %v363
    %v365 = vmax.f32 %v364, 0.0
    %s366 = sld [smem:[#allocation10 + $0x1a]]
    %v367 = vstv %s366
    %v368 = vmul.f32 %v367, %v365
    %v369 = vadd.f32 %v358, %v368
    %s370 = sld [smem:[#allocation7 + $0x1b]]
    %v371 = vstv %s370
    %v372 = vmul.f32 %v371, %v72
    %s373 = sld [smem:[#allocation8 + $0x1b]]
    %v374 = vstv %s373
    %v375 = vadd.f32 %v372, %v374
    %v376 = vmax.f32 %v375, 0.0
    %s377 = sld [smem:[#allocation10 + $0x1b]]
    %v378 = vstv %s377
    %v379 = vmul.f32 %v378, %v376
    %v380 = vadd.f32 %v369, %v379
    %s381 = sld [smem:[#allocation7 + $0x1c]]
    %v382 = vstv %s381
    %v383 = vmul.f32 %v382, %v72
    %s384 = sld [smem:[#allocation8 + $0x1c]]
    %v385 = vstv %s384
    %v386 = vadd.f32 %v383, %v385
    %v387 = vmax.f32 %v386, 0.0
    %s388 = sld [smem:[#allocation10 + $0x1c]]
    %v389 = vstv %s388
    %v390 = vmul.f32 %v389, %v387
    %v391 = vadd.f32 %v380, %v390
    %s392 = sld [smem:[#allocation7 + $0x1d]]
    %v393 = vstv %s392
    %v394 = vmul.f32 %v393, %v72
    %s395 = sld [smem:[#allocation8 + $0x1d]]
    %v396 = vstv %s395
    %v397 = vadd.f32 %v394, %v396
    %v398 = vmax.f32 %v397, 0.0
    %s399 = sld [smem:[#allocation10 + $0x1d]]
    %v400 = vstv %s399
    %v401 = vmul.f32 %v400, %v398
    %v402 = vadd.f32 %v391, %v401
    %s403 = sld [smem:[#allocation7 + $0x1e]]
    %v404 = vstv %s403
    %v405 = vmul.f32 %v404, %v72
    %s406 = sld [smem:[#allocation8 + $0x1e]]
    %v407 = vstv %s406
    %v408 = vadd.f32 %v405, %v407
    %v409 = vmax.f32 %v408, 0.0
    %s410 = sld [smem:[#allocation10 + $0x1e]]
    %v411 = vstv %s410
    %v412 = vmul.f32 %v411, %v409
    %v413 = vadd.f32 %v402, %v412
    %s414 = sld [smem:[#allocation7 + $0x1f]]
    %v415 = vstv %s414
    %v416 = vmul.f32 %v415, %v72
    %s417 = sld [smem:[#allocation8 + $0x1f]]
    %v418 = vstv %s417
    %v419 = vadd.f32 %v416, %v418
    %v420 = vmax.f32 %v419, 0.0
    %s421 = sld [smem:[#allocation10 + $0x1f]]
    %v422 = vstv %s421
    %v423 = vmul.f32 %v422, %v420
    %v424 = vadd.f32 %v413, %v423
    %s425 = sld [smem:[#allocation2]]
    %v426 = vstv %s425
    %v427 = vadd.f32 %v424, %v426
    %v428 = vmax.f32 %v427, 0.0
    %429 = vst [vmem:[#allocation11] sm:$0xff] %v428
    // Predicated region
    $region38: #{tpu_custom_call.1} parent=1 // pred_check
      _
    $region39: #{tpu_custom_call.1} parent=1 // pred_check_branch
      %431 = sbr.rel (0) target = $region41
    $region40: #{tpu_custom_call.1} parent=1 // pred_region
      %433 = vsyncadd [#allocation5], 0
      %s435 = sshll.u32 [#allocation11], 4
      %s436 = int_to_ptr.vmem [resolvable:$true] %s435
      %s437 = sshll.u32 %s5, 4
      %s438 = int_to_ptr.hbm [resolvable:$true] %s437
      %440 = dma.vmem_to_hbm [thread:$0]  %s436, 128, %s438, [#allocation5]
    $region41: #{tpu_custom_call.1} parent=1 // pred_fallthru
      _
    // Predicated region
    $region42: #{tpu_custom_call.1} parent=1 // pred_check
      _
    $region43: #{tpu_custom_call.1} parent=1 // pred_check_branch
      %442 = sbr.rel (0) target = $region45
    $region44: #{tpu_custom_call.1} parent=1 // pred_region
      %444 = dma.done [#allocation5], 128
    $region45: #{tpu_custom_call.1} parent=1 // pred_fallthru
      _
    %445 = vsyncpa [#allocation4], 1
    %446 = vsyncpa [#allocation5], 1
    %447 = vsyncpa [#allocation6], 1
    %448 = vsyncpa [#allocation9], 1

</llo_original>
